<compile_context>
chip_gen: v5e
topology: v5e:2x2
jax: 0.10.0
libtpu: 0.0.40
codegen_flags: <defaults>
</compile_context>

<pallas_src>
import math
from functools import partial

import jax
import jax.numpy as jnp
from jax import lax
from jax.experimental import pallas as pl
from jax.experimental.pallas import tpu as pltpu


def _round_up(x, m):
    return ((x + m - 1) // m) * m


def _cdiv(a, b):
    return -(-a // b)


# ---------------------------------------------------------------------------
# Fused NNBlock kernel: one grid step = (one image, one tile of spatial rows)
# ---------------------------------------------------------------------------
def _nnblock_kernel(x_ref, w3_ref, wr_ref, scale_ref, shift_ref, rbias_ref, o_ref):
    # x_ref block: (1, row_tile, 9*cin) bf16, tap-packed (im2col) activations.
    x = x_ref[0]

    # 3x3 conv as a single K = 9*cin matmul, f32 accumulation on the MXU.
    y = jnp.dot(x, w3_ref[...], preferred_element_type=jnp.float32)
    # fused conv-bias + eval-mode BatchNorm + ReLU
    y = jnp.maximum(y * scale_ref[...] + shift_ref[...], 0.0)

    # TODO(synk): PDU and AttentionModule class bodies are not in the provided
    # source; they are treated as shape-preserving identities here.

    # Residual 1x1 conv: same packed operand, weights only in the centre-tap
    # rows of wr_ref (MXU has huge slack here, per the review).
    r = jnp.dot(x, wr_ref[...], preferred_element_type=jnp.float32)

    o_ref[0] = (y + r + rbias_ref[...]).astype(o_ref.dtype)


# ---------------------------------------------------------------------------
# Wrapper: NCHW in / NCHW out
# ---------------------------------------------------------------------------
def nnblock_forward_nchw(params, x_nchw, *, row_tile=None):
    N, cin, H, W = x_nchw.shape
    assert cin == params["ch_in"]
    ch_out = params["ch_out"]
    cout_p = params["w3"].shape[-1]
    K = 9 * cin
    rout = H * W

    # --- pre-pass: NCHW -> NHWC, zero-pad spatially, single bf16 cast,
    #     tap-pack into a lane-dense (rows, 9*cin) operand.
    x = jnp.transpose(x_nchw, (0, 2, 3, 1)).astype(jnp.bfloat16)
    xp = jnp.pad(x, ((0, 0), (1, 1), (1, 1), (0, 0)))
    taps = [xp[:, di:di + H, dj:dj + W, :] for di in range(3) for dj in range(3)]
    lhs = jnp.concatenate(taps, axis=-1).reshape(N, rout, K)

    # --- spatial row tiling (keeps v7x VMEM small, gives a parallel axis
    #     independent of batch size)
    if row_tile is None:
        max_tile = 4096
        n_tiles = max(1, _cdiv(rout, max_tile))
        row_tile = _round_up(_cdiv(rout, n_tiles), 8)
    n_tiles = _cdiv(rout, row_tile)
    rows_p = row_tile * n_tiles
    if rows_p != rout:
        lhs = jnp.pad(lhs, ((0, 0), (0, rows_p - rout), (0, 0)))

    out = pl.pallas_call(
        _nnblock_kernel,
        out_shape=jax.ShapeDtypeStruct((N, rows_p, cout_p), jnp.bfloat16),
        grid_spec=pltpu.PrefetchScalarGridSpec(
            num_scalar_prefetch=0,
            grid=(N, n_tiles),
            in_specs=[
                pl.BlockSpec((1, row_tile, K), lambda n, t: (n, t, 0)),   # packed acts
                pl.BlockSpec((K, cout_p), lambda n, t: (0, 0)),           # 3x3 weights
                pl.BlockSpec((K, cout_p), lambda n, t: (0, 0)),           # 1x1 weights (centre rows)
                pl.BlockSpec((1, cout_p), lambda n, t: (0, 0)),           # BN scale
                pl.BlockSpec((1, cout_p), lambda n, t: (0, 0)),           # conv-bias + BN shift
                pl.BlockSpec((1, cout_p), lambda n, t: (0, 0)),           # residual bias
            ],
            out_specs=pl.BlockSpec((1, row_tile, cout_p), lambda n, t: (n, t, 0)),
        ),
        compiler_params=pltpu.CompilerParams(
            dimension_semantics=("parallel", "parallel"),
            vmem_limit_bytes=48 * 1024 * 1024),
    )(lhs, params["w3"], params["wr"], params["scale"], params["shift"],
      params["rbias"])

    # --- post-pass: drop padded rows / channels, back to NCHW float32.
    y = out[:, :rout, :ch_out].reshape(N, H, W, ch_out)
    return jnp.transpose(y, (0, 3, 1, 2)).astype(jnp.float32)


# ---------------------------------------------------------------------------
# Parameter init: PyTorch-like uniform fan-in init, then fold & pad ONCE
# ---------------------------------------------------------------------------
def init_nnblock_params(key, ch_in, ch_out):
    k = jax.random.split(key, 6)

    fan1 = ch_in * 9
    b1lim = 1.0 / math.sqrt(fan1)
    w1 = jax.random.uniform(k[0], (ch_out, ch_in, 3, 3), jnp.float32, -b1lim, b1lim)
    b1 = jax.random.uniform(k[1], (ch_out,), jnp.float32, -b1lim, b1lim)

    gamma = jax.random.uniform(k[2], (ch_out,), jnp.float32, 0.8, 1.2)
    beta = jax.random.uniform(k[3], (ch_out,), jnp.float32, -0.1, 0.1)
    mean = jnp.zeros((ch_out,), jnp.float32)          # eval-mode running stats
    var = jnp.ones((ch_out,), jnp.float32)

    fanr = ch_in
    brlim = 1.0 / math.sqrt(fanr)
    wr = jax.random.uniform(k[4], (ch_out, ch_in, 1, 1), jnp.float32, -brlim, brlim)
    br = jax.random.uniform(k[5], (ch_out,), jnp.float32, -brlim, brlim)

    # ---- kernel-ready layouts ----
    cout_p = _round_up(ch_out, 128)
    K = 9 * ch_in
    scale = gamma / jnp.sqrt(var + 1e-5)
    shift = (b1 - mean) * scale + beta                # conv bias folded into BN shift

    # (O,I,kh,kw) -> row index (kh*3+kw)*cin + c, matching the wrapper tap order
    w3 = jnp.transpose(w1, (2, 3, 1, 0)).reshape(K, ch_out)
    w3 = jnp.pad(w3, ((0, 0), (0, cout_p - ch_out))).astype(jnp.bfloat16)

    # residual 1x1 weights in the centre-tap rows of a (K, cout_p) matrix
    wr_mat = jnp.transpose(wr[:, :, 0, 0], (1, 0))    # (cin, cout)
    wr_ext = jnp.zeros((K, ch_out), jnp.float32)
    wr_ext = wr_ext.at[4 * ch_in:5 * ch_in, :].set(wr_mat)
    wr_ext = jnp.pad(wr_ext, ((0, 0), (0, cout_p - ch_out))).astype(jnp.bfloat16)

    def padrow(v):
        return jnp.pad(v, (0, cout_p - ch_out)).reshape(1, cout_p).astype(jnp.float32)

    kernel_params = {
        "ch_in": ch_in, "ch_out": ch_out,
        "w3": w3, "wr": wr_ext,
        "scale": padrow(scale), "shift": padrow(shift), "rbias": padrow(br),
    }
    raw_params = {"w1": w1, "b1": b1, "gamma": gamma, "beta": beta,
                  "mean": mean, "var": var, "wr": wr, "br": br}
    return kernel_params, raw_params


# ---------------------------------------------------------------------------
# Pure-JAX reference (full f32) for a correctness sanity check
# ---------------------------------------------------------------------------
def _reference_forward(x_nchw, raw):
    dn = ("NCHW", "OIHW", "NCHW")
    out = lax.conv_general_dilated(x_nchw, raw["w1"], (1, 1), "SAME",
                                   dimension_numbers=dn)
    out = out + raw["b1"][None, :, None, None]
    scale = raw["gamma"] / jnp.sqrt(raw["var"] + 1e-5)
    out = (out - raw["mean"][None, :, None, None]) * scale[None, :, None, None] \
          + raw["beta"][None, :, None, None]
    out = jnp.maximum(out, 0.0)
    res = lax.conv_general_dilated(x_nchw, raw["wr"], (1, 1), "VALID",
                                   dimension_numbers=dn)
    res = res + raw["br"][None, :, None, None]
    return out + res


# ---------------------------------------------------------------------------
if __name__ == "__main__":
    ch_in, ch_out = 4, 32
    N, H, W = 2, 16, 16

    params, raw = init_nnblock_params(jax.random.PRNGKey(0), ch_in, ch_out)
    x = jax.random.normal(jax.random.PRNGKey(0), (N, ch_in, H, W), jnp.float32)

    fwd = jax.jit(lambda xx: nnblock_forward_nchw(params, xx))
    y = jax.block_until_ready(fwd(x))

    assert y.shape == (N, ch_out, H, W) and y.dtype == jnp.float32
    assert bool(jnp.all(jnp.isfinite(y)))

    y_ref = _reference_forward(x, raw)
    err = float(jnp.max(jnp.abs(y - y_ref)))
    assert err < 1e-1, f"max abs err vs f32 reference: {err}"  # bf16 MXU + bf16 writeback

    print("KERNEL_OK")
</pallas_src>

<mosaic_0001>
module attributes {stable_mosaic.version = 11 : i64} {
  func.func @_nnblock_kernel(%arg0: i32, %arg1: i32, %arg2: memref<1x256x36xbf16, #tpu.memory_space<vmem>>, %arg3: memref<36x128xbf16, #tpu.memory_space<vmem>>, %arg4: memref<36x128xbf16, #tpu.memory_space<vmem>>, %arg5: memref<1x128xf32, #tpu.memory_space<vmem>>, %arg6: memref<1x128xf32, #tpu.memory_space<vmem>>, %arg7: memref<1x128xf32, #tpu.memory_space<vmem>>, %arg8: memref<1x256x128xbf16, #tpu.memory_space<vmem>>) attributes {dimension_semantics = [#tpu.dimension_semantics<parallel>, #tpu.dimension_semantics<parallel>], iteration_bounds = array<i64: 2, 1>, scalar_prefetch = 0 : i64, scratch_operands = 0 : i64, tpu.core_type = #tpu.core_type<tc>, window_params = [{transform_indices = @transform_0, window_bounds = array<i64: 1, 256, 36>}, {pipeline_mode = #tpu.pipeline_mode<synchronous>, transform_indices = @transform_1, window_bounds = array<i64: 36, 128>}, {pipeline_mode = #tpu.pipeline_mode<synchronous>, transform_indices = @transform_2, window_bounds = array<i64: 36, 128>}, {pipeline_mode = #tpu.pipeline_mode<synchronous>, transform_indices = @transform_3, window_bounds = array<i64: 1, 128>}, {pipeline_mode = #tpu.pipeline_mode<synchronous>, transform_indices = @transform_4, window_bounds = array<i64: 1, 128>}, {pipeline_mode = #tpu.pipeline_mode<synchronous>, transform_indices = @transform_5, window_bounds = array<i64: 1, 128>}, {transform_indices = @transform_6, window_bounds = array<i64: 1, 256, 128>}]} {
    %c0 = arith.constant 0 : index
    %c0_0 = arith.constant 0 : index
    %c0_1 = arith.constant 0 : index
    %0 = vector.load %arg2[%c0, %c0_0, %c0_1] : memref<1x256x36xbf16, #tpu.memory_space<vmem>>, vector<1x256x36xbf16>
    %1 = vector.shape_cast %0 : vector<1x256x36xbf16> to vector<256x36xbf16>
    %c0_2 = arith.constant 0 : index
    %c0_3 = arith.constant 0 : index
    %2 = vector.load %arg3[%c0_2, %c0_3] : memref<36x128xbf16, #tpu.memory_space<vmem>>, vector<36x128xbf16>
    %cst = arith.constant dense<0.000000e+00> : vector<256x128xf32>
    %3 = tpu.matmul %1, %2, %cst {dimension_numbers = #tpu.dot_dimension_numbers<[1], [0], [0], [1], [0, 0, 1, 1], [], []>} : vector<256x36xbf16>, vector<36x128xbf16>, vector<256x128xf32> -> vector<256x128xf32>
    %c0_4 = arith.constant 0 : index
    %c0_5 = arith.constant 0 : index
    %4 = vector.load %arg5[%c0_4, %c0_5] : memref<1x128xf32, #tpu.memory_space<vmem>>, vector<1x128xf32>
    %5 = vector.broadcast %4 : vector<1x128xf32> to vector<256x128xf32>
    %6 = arith.mulf %3, %5 : vector<256x128xf32>
    %c0_6 = arith.constant 0 : index
    %c0_7 = arith.constant 0 : index
    %7 = vector.load %arg6[%c0_6, %c0_7] : memref<1x128xf32, #tpu.memory_space<vmem>>, vector<1x128xf32>
    %8 = vector.broadcast %7 : vector<1x128xf32> to vector<256x128xf32>
    %9 = arith.addf %6, %8 : vector<256x128xf32>
    %cst_8 = arith.constant 0.000000e+00 : f32
    %10 = vector.broadcast %cst_8 : f32 to vector<256x128xf32>
    %11 = arith.maximumf %9, %10 : vector<256x128xf32>
    %c0_9 = arith.constant 0 : index
    %c0_10 = arith.constant 0 : index
    %12 = vector.load %arg4[%c0_9, %c0_10] : memref<36x128xbf16, #tpu.memory_space<vmem>>, vector<36x128xbf16>
    %cst_11 = arith.constant dense<0.000000e+00> : vector<256x128xf32>
    %13 = tpu.matmul %1, %12, %cst_11 {dimension_numbers = #tpu.dot_dimension_numbers<[1], [0], [0], [1], [0, 0, 1, 1], [], []>} : vector<256x36xbf16>, vector<36x128xbf16>, vector<256x128xf32> -> vector<256x128xf32>
    %14 = arith.addf %11, %13 : vector<256x128xf32>
    %c0_12 = arith.constant 0 : index
    %c0_13 = arith.constant 0 : index
    %15 = vector.load %arg7[%c0_12, %c0_13] : memref<1x128xf32, #tpu.memory_space<vmem>>, vector<1x128xf32>
    %16 = vector.broadcast %15 : vector<1x128xf32> to vector<256x128xf32>
    %17 = arith.addf %14, %16 : vector<256x128xf32>
    %18 = arith.truncf %17 : vector<256x128xf32> to vector<256x128xbf16>
    %c0_14 = arith.constant 0 : index
    %c0_15 = arith.constant 0 : index
    %c0_16 = arith.constant 0 : index
    %19 = vector.load %arg8[%c0_14, %c0_15, %c0_16] : memref<1x256x128xbf16, #tpu.memory_space<vmem>>, vector<1x256x128xbf16>
    %20 = vector.shape_cast %19 : vector<1x256x128xbf16> to vector<256x128xbf16>
    %21 = vector.shape_cast %18 : vector<256x128xbf16> to vector<1x256x128xbf16>
    tpu.vector_store %arg8[%c0_14, %c0_15, %c0_16], %21 {strides = array<i32>} : memref<1x256x128xbf16, #tpu.memory_space<vmem>>, vector<1x256x128xbf16>,
    return
  }
  func.func @transform_0(%arg0: i32, %arg1: i32) -> (i32, i32, i32) {
    %c0_i32 = arith.constant 0 : i32
    %c0_i32_0 = arith.constant 0 : i32
    return %arg0, %arg1, %c0_i32 : i32, i32, i32
  }
  func.func @transform_1(%arg0: i32, %arg1: i32) -> (i32, i32) {
    %c0_i32 = arith.constant 0 : i32
    %c0_i32_0 = arith.constant 0 : i32
    %c0_i32_1 = arith.constant 0 : i32
    return %c0_i32, %c0_i32_0 : i32, i32
  }
  func.func @transform_2(%arg0: i32, %arg1: i32) -> (i32, i32) {
    %c0_i32 = arith.constant 0 : i32
    %c0_i32_0 = arith.constant 0 : i32
    %c0_i32_1 = arith.constant 0 : i32
    return %c0_i32, %c0_i32_0 : i32, i32
  }
  func.func @transform_3(%arg0: i32, %arg1: i32) -> (i32, i32) {
    %c0_i32 = arith.constant 0 : i32
    %c0_i32_0 = arith.constant 0 : i32
    %c0_i32_1 = arith.constant 0 : i32
    return %c0_i32, %c0_i32_0 : i32, i32
  }
  func.func @transform_4(%arg0: i32, %arg1: i32) -> (i32, i32) {
    %c0_i32 = arith.constant 0 : i32
    %c0_i32_0 = arith.constant 0 : i32
    %c0_i32_1 = arith.constant 0 : i32
    return %c0_i32, %c0_i32_0 : i32, i32
  }
  func.func @transform_5(%arg0: i32, %arg1: i32) -> (i32, i32) {
    %c0_i32 = arith.constant 0 : i32
    %c0_i32_0 = arith.constant 0 : i32
    %c0_i32_1 = arith.constant 0 : i32
    return %c0_i32, %c0_i32_0 : i32, i32
  }
  func.func @transform_6(%arg0: i32, %arg1: i32) -> (i32, i32, i32) {
    %c0_i32 = arith.constant 0 : i32
    %c0_i32_0 = arith.constant 0 : i32
    return %arg0, %arg1, %c0_i32 : i32, i32, i32
  }
}

</mosaic_0001>

<llo_original>
// kernel: _lambda_.1
$region0: #{_lambda_.1}
  #allocation0 [shape = 'u32[]', space=smem, size = 0x4, offset = 0x4, fixed_abs, tag = 'smem constant byte address 0x4 - core index']
  #allocation1 [shape = 'u32[72,128]{1,0:T(1,128)}', space=vmem, size = 0x9000, scoped, tag = 'internal scratch']
  %s0 = inlined_call_operand.vmem [shape: bf16[2,256,36], index: 0, kind: input, shape index: {}]
  %s1 = inlined_call_operand.vmem [shape: bf16[36,128], index: 1, kind: input, shape index: {}]
  %s2 = inlined_call_operand.vmem [shape: bf16[36,128], index: 2, kind: input, shape index: {}]
  %s3 = inlined_call_operand.vmem [shape: f32[1,128], index: 3, kind: input, shape index: {}]
  %s4 = inlined_call_operand.vmem [shape: f32[1,128], index: 4, kind: input, shape index: {}]
  %s5 = inlined_call_operand.vmem [shape: f32[1,128], index: 5, kind: input, shape index: {}]
  %s6 = inlined_call_operand.vmem [shape: bf16[2,256,128], index: 6, kind: output, shape index: {}]
  %s7 = sld [smem:[#allocation0]]
  $region57: #{_lambda_.1} parent=0
    _
  %s9 = ssub.s32 1, %s7
  %s10 = scalar_select 0, %s9, %s7
  loop: start=0, step=1, limit=4
  $region2: #{_lambda_.1} parent=0 // loop_pre_header
    _
  $region3: #{_lambda_.1} parent=0 // loop_header
    %s12 = sphi 0, %s16
    %p13 = scmp.ge.s32.totalorder %s12, 4
    %s19 = sphi 0, %s31
    %s20 = sphi 0, %s27
    %s21 = sphi 0, %s19
    %s22 = sphi 0, %s20
    %s23 = sphi 0, %s21
    %s24 = sphi 0, %s22
    %s36 = sphi 0, %s38
    %s39 = sphi 0, %s36
    %s40 = sphi 0, %s39
    %s56 = sphi 0, %s40
    %s60 = sphi 0, %s60
    %s62 = sphi 0, %s60
    %s63 = sphi 0, %s62
    %s77 = sphi 0, %s63
    %s81 = sphi 0, %s81
    %s83 = sphi 0, %s81
    %s84 = sphi 0, %s83
    %s98 = sphi 0, %s84
    %s102 = sphi 0, %s102
    %s104 = sphi 0, %s102
    %s105 = sphi 0, %s104
    %s119 = sphi 0, %s105
    %s123 = sphi 0, %s123
    %s125 = sphi 0, %s123
    %s126 = sphi 0, %s125
    %s140 = sphi 0, %s126
    %s144 = sphi 0, %s144
    %s146 = sphi 0, %s144
    %s147 = sphi 0, %s146
    %s161 = sphi 0, %s147
    %s169 = sphi 0, %s171
    %s172 = sphi 0, %s169
    %s173 = sphi 0, %s172
    %s189 = sphi 0, %s173
  $region4: #{_lambda_.1} parent=0 // loop_header_branch
    %15 = sbr.rel (%p13) target = $region8
  $region5: #{_lambda_.1} parent=0 // loop_body
    %s17 = ssub.s32 %s12, 1
    %s18 = ssub.s32 %s12, 2
    %s25 = sadd.s32 1, %s20
    %p26 = scmp.ge.s32.totalorder %s25, 1
    %s27 = scalar_select %p26, 0, %s25
    %s28 = sadd.s32 1, %s19
    %s29 = scalar_select %p26, %s28, %s19
    %p30 = scmp.ge.s32.totalorder %s29, 2
    %s31 = scalar_select %p30, 0, %s29
    %s32 = ssub.s32 %s19, %s31
    %s33 = ssub.s32 %s20, %s27
    %s34 = sor.u32 %s32, %s33
    %p35 = scmp.eq.s32.totalorder %s34, 0
    %s37 = sadd.s32 %s36, 1
    %s38 = scalar_select %p35, %s36, %s37
    %p41 = pneg %p35
    %p42 = scmp.eq.s32.totalorder %s12, 1
    %p43 = por %p41, %p42
    %p44 = scmp.ne.s32.totalorder %s36, %s39
    %p45 = scmp.eq.s32.totalorder %s12, 0
    %p46 = por %p44, %p45
    %p47 = scmp.ne.s32.totalorder %s36, %s39
    %p48 = scmp.eq.s32.totalorder %s17, 1
    %p49 = por %p47, %p48
    %p50 = scmp.ne.s32.totalorder %s39, %s40
    %p51 = scmp.eq.s32.totalorder %s17, 0
    %p52 = por %p50, %p51
    %p53 = scmp.ne.s32.totalorder %s39, %s40
    %p54 = scmp.eq.s32.totalorder %s18, 1
    %p55 = por %p53, %p54
    %p57 = scmp.ne.s32.totalorder %s40, %s56
    %p58 = scmp.eq.s32.totalorder %s18, 0
    %p59 = por %p57, %p58
    %s61 = sadd.s32 %s60, 1
    %p64 = scmp.eq.s32.totalorder %s12, 1
    %p65 = scmp.ne.s32.totalorder %s60, %s62
    %p66 = scmp.eq.s32.totalorder %s12, 0
    %p67 = por %p65, %p66
    %p68 = scmp.ne.s32.totalorder %s60, %s62
    %p69 = scmp.eq.s32.totalorder %s17, 1
    %p70 = por %p68, %p69
    %p71 = scmp.ne.s32.totalorder %s62, %s63
    %p72 = scmp.eq.s32.totalorder %s17, 0
    %p73 = por %p71, %p72
    %p74 = scmp.ne.s32.totalorder %s62, %s63
    %p75 = scmp.eq.s32.totalorder %s18, 1
    %p76 = por %p74, %p75
    %p78 = scmp.ne.s32.totalorder %s63, %s77
    %p79 = scmp.eq.s32.totalorder %s18, 0
    %p80 = por %p78, %p79
    %s82 = sadd.s32 %s81, 1
    %p85 = scmp.eq.s32.totalorder %s12, 1
    %p86 = scmp.ne.s32.totalorder %s81, %s83
    %p87 = scmp.eq.s32.totalorder %s12, 0
    %p88 = por %p86, %p87
    %p89 = scmp.ne.s32.totalorder %s81, %s83
    %p90 = scmp.eq.s32.totalorder %s17, 1
    %p91 = por %p89, %p90
    %p92 = scmp.ne.s32.totalorder %s83, %s84
    %p93 = scmp.eq.s32.totalorder %s17, 0
    %p94 = por %p92, %p93
    %p95 = scmp.ne.s32.totalorder %s83, %s84
    %p96 = scmp.eq.s32.totalorder %s18, 1
    %p97 = por %p95, %p96
    %p99 = scmp.ne.s32.totalorder %s84, %s98
    %p100 = scmp.eq.s32.totalorder %s18, 0
    %p101 = por %p99, %p100
    %s103 = sadd.s32 %s102, 1
    %p106 = scmp.eq.s32.totalorder %s12, 1
    %p107 = scmp.ne.s32.totalorder %s102, %s104
    %p108 = scmp.eq.s32.totalorder %s12, 0
    %p109 = por %p107, %p108
    %p110 = scmp.ne.s32.totalorder %s102, %s104
    %p111 = scmp.eq.s32.totalorder %s17, 1
    %p112 = por %p110, %p111
    %p113 = scmp.ne.s32.totalorder %s104, %s105
    %p114 = scmp.eq.s32.totalorder %s17, 0
    %p115 = por %p113, %p114
    %p116 = scmp.ne.s32.totalorder %s104, %s105
    %p117 = scmp.eq.s32.totalorder %s18, 1
    %p118 = por %p116, %p117
    %p120 = scmp.ne.s32.totalorder %s105, %s119
    %p121 = scmp.eq.s32.totalorder %s18, 0
    %p122 = por %p120, %p121
    %s124 = sadd.s32 %s123, 1
    %p127 = scmp.eq.s32.totalorder %s12, 1
    %p128 = scmp.ne.s32.totalorder %s123, %s125
    %p129 = scmp.eq.s32.totalorder %s12, 0
    %p130 = por %p128, %p129
    %p131 = scmp.ne.s32.totalorder %s123, %s125
    %p132 = scmp.eq.s32.totalorder %s17, 1
    %p133 = por %p131, %p132
    %p134 = scmp.ne.s32.totalorder %s125, %s126
    %p135 = scmp.eq.s32.totalorder %s17, 0
    %p136 = por %p134, %p135
    %p137 = scmp.ne.s32.totalorder %s125, %s126
    %p138 = scmp.eq.s32.totalorder %s18, 1
    %p139 = por %p137, %p138
    %p141 = scmp.ne.s32.totalorder %s126, %s140
    %p142 = scmp.eq.s32.totalorder %s18, 0
    %p143 = por %p141, %p142
    %s145 = sadd.s32 %s144, 1
    %p148 = scmp.eq.s32.totalorder %s12, 1
    %p149 = scmp.ne.s32.totalorder %s144, %s146
    %p150 = scmp.eq.s32.totalorder %s12, 0
    %p151 = por %p149, %p150
    %p152 = scmp.ne.s32.totalorder %s144, %s146
    %p153 = scmp.eq.s32.totalorder %s17, 1
    %p154 = por %p152, %p153
    %p155 = scmp.ne.s32.totalorder %s146, %s147
    %p156 = scmp.eq.s32.totalorder %s17, 0
    %p157 = por %p155, %p156
    %p158 = scmp.ne.s32.totalorder %s146, %s147
    %p159 = scmp.eq.s32.totalorder %s18, 1
    %p160 = por %p158, %p159
    %p162 = scmp.ne.s32.totalorder %s147, %s161
    %p163 = scmp.eq.s32.totalorder %s18, 0
    %p164 = por %p162, %p163
    %s165 = ssub.s32 %s19, %s31
    %s166 = ssub.s32 %s20, %s27
    %s167 = sor.u32 %s165, %s166
    %p168 = scmp.eq.s32.totalorder %s167, 0
    %s170 = sadd.s32 %s169, 1
    %s171 = scalar_select %p168, %s169, %s170
    %p174 = pneg %p168
    %p175 = scmp.eq.s32.totalorder %s12, 1
    %p176 = por %p174, %p175
    %p177 = scmp.ne.s32.totalorder %s169, %s172
    %p178 = scmp.eq.s32.totalorder %s12, 0
    %p179 = por %p177, %p178
    %p180 = scmp.ne.s32.totalorder %s169, %s172
    %p181 = scmp.eq.s32.totalorder %s17, 1
    %p182 = por %p180, %p181
    %p183 = scmp.ne.s32.totalorder %s172, %s173
    %p184 = scmp.eq.s32.totalorder %s17, 0
    %p185 = por %p183, %p184
    %p186 = scmp.ne.s32.totalorder %s172, %s173
    %p187 = scmp.eq.s32.totalorder %s18, 1
    %p188 = por %p186, %p187
    %p190 = scmp.ne.s32.totalorder %s173, %s189
    %p191 = scmp.eq.s32.totalorder %s18, 0
    %p192 = por %p190, %p191
    %p193 = scmp.le.s32.totalorder 1, %s12
    %p194 = scmp.lt.s32.totalorder %s12, 3
    %p195 = pnand %p193, %p194
    %p196 = pneg %p195
    // Predicated region
    $region9: #{_lambda_.1} parent=5 // pred_check
      _
    $region10: #{_lambda_.1} parent=5 // pred_check_branch
      %198 = sbr.rel (%p195) target = $region12
    $region11: #{_lambda_.1} parent=5 // pred_region
      %s199 = ssub.s32 %s12, 1
      // Predicated region
      $region13: #{_lambda_.1} parent=11 // pred_check
        %p200 = pneg %p73
      $region14: #{_lambda_.1} parent=11 // pred_check_branch
        %202 = sbr.rel (%p200) target = $region16
      $region15: #{_lambda_.1} parent=11 // pred_region
        _
      $region16: #{_lambda_.1} parent=11 // pred_fallthru
        _
      // Predicated region
      $region17: #{_lambda_.1} parent=11 // pred_check
        %p203 = pneg %p94
      $region18: #{_lambda_.1} parent=11 // pred_check_branch
        %205 = sbr.rel (%p203) target = $region20
      $region19: #{_lambda_.1} parent=11 // pred_region
        _
      $region20: #{_lambda_.1} parent=11 // pred_fallthru
        _
      // Predicated region
      $region21: #{_lambda_.1} parent=11 // pred_check
        %p206 = pneg %p115
      $region22: #{_lambda_.1} parent=11 // pred_check_branch
        %208 = sbr.rel (%p206) target = $region24
      $region23: #{_lambda_.1} parent=11 // pred_region
        _
      $region24: #{_lambda_.1} parent=11 // pred_fallthru
        _
      // Predicated region
      $region25: #{_lambda_.1} parent=11 // pred_check
        %p209 = pneg %p136
      $region26: #{_lambda_.1} parent=11 // pred_check_branch
        %211 = sbr.rel (%p209) target = $region28
      $region27: #{_lambda_.1} parent=11 // pred_region
        _
      $region28: #{_lambda_.1} parent=11 // pred_fallthru
        _
      // Predicated region
      $region29: #{_lambda_.1} parent=11 // pred_check
        %p212 = pneg %p157
      $region30: #{_lambda_.1} parent=11 // pred_check_branch
        %214 = sbr.rel (%p212) target = $region32
      $region31: #{_lambda_.1} parent=11 // pred_region
        _
      $region32: #{_lambda_.1} parent=11 // pred_fallthru
        _
    $region12: #{_lambda_.1} parent=5 // pred_fallthru
      _
    %p215 = scmp.lt.s32.totalorder %s12, 2
    // Predicated region
    $region33: #{_lambda_.1} parent=5 // pred_check
      %p216 = pneg %p215
    $region34: #{_lambda_.1} parent=5 // pred_check_branch
      %218 = sbr.rel (%p216) target = $region36
    $region35: #{_lambda_.1} parent=5 // pred_region
      // Predicated region
      $region37: #{_lambda_.1} parent=35 // pred_check
        %p219 = pneg %p46
      $region38: #{_lambda_.1} parent=35 // pred_check_branch
        %221 = sbr.rel (%p219) target = $region40
      $region39: #{_lambda_.1} parent=35 // pred_region
        %s222 = smul.u32 32, %s20
        %p223 = scmp.lt.s32.totalorder %s19, 1
        %s224 = scalar_select %p223, %s19, 1
        %p225 = scmp.lt.s32.totalorder %s222, 31
        %s226 = scalar_select %p225, %s222, 31
        %s227 = smul.addr %s224, 32
        %s228 = sadd.s32 %s226, %s227
        %s229 = smul.addr %s228, 4
        %s230 = scalar_lea.vmem %s0, %s229
        %s231 = smul.u32 32, %s20
      $region40: #{_lambda_.1} parent=35 // pred_fallthru
        _
    $region36: #{_lambda_.1} parent=5 // pred_fallthru
      _
    %p232 = scmp.le.s32.totalorder 1, %s12
    %p233 = scmp.lt.s32.totalorder %s12, 3
    %p234 = pnand %p232, %p233
    %p235 = pneg %p234
    // Predicated region
    $region41: #{_lambda_.1} parent=5 // pred_check
      _
    $region42: #{_lambda_.1} parent=5 // pred_check_branch
      %237 = sbr.rel (%p234) target = $region44
    $region43: #{_lambda_.1} parent=5 // pred_region
      %s238 = ssub.s32 %s12, 1
      %s239 = smul.u32 32, %s22
      %p240 = scmp.lt.s32.totalorder %s21, 1
      %s241 = scalar_select %p240, %s21, 1
      %p242 = scmp.lt.s32.totalorder %s239, 31
      %s243 = scalar_select %p242, %s239, 31
      %s244 = smul.addr %s241, 32
      %s245 = sadd.s32 %s243, %s244
      %s246 = smul.addr %s245, 4
      %s247 = scalar_lea.vmem %s0, %s246
      %p248 = pneg %p52
      %p249 = pneg %p49
      %p250 = pneg %p73
      %p251 = pneg %p70
      %p252 = pneg %p94
      %p253 = pneg %p91
      %p254 = pneg %p115
      %p255 = pneg %p112
      %p256 = pneg %p136
      %p257 = pneg %p133
      %p258 = pneg %p157
      %p259 = pneg %p154
      %p260 = pneg %p185
      %p261 = pneg %p182
      %s262 = smul.u32 32, %s22
      %p263 = scmp.lt.s32.totalorder %s21, 1
      %s264 = scalar_select %p263, %s21, 1
      %p265 = scmp.lt.s32.totalorder %s262, 31
      %s266 = scalar_select %p265, %s262, 31
      %s267 = smul.addr %s264, 32
      %s268 = sadd.s32 %s266, %s267
      %s269 = smul.addr %s268, 4
      %s270 = scalar_lea.vmem %s6, %s269
      %s271 = smul.u32 32, %s22
      %p272 = scmp.lt.s32.totalorder %s21, 1
      %s273 = scalar_select %p272, %s21, 1
      %p274 = scmp.lt.s32.totalorder %s271, 31
      %s275 = scalar_select %p274, %s271, 31
      %s276 = smul.addr %s273, 32
      %s277 = sadd.s32 %s275, %s276
      %s278 = smul.addr %s277, 4
      %s279 = scalar_lea.vmem %s0, %s278
      %s280 = smul.u32 32, %s22
      %s281 = smul.u32 32, %s22
      %p282 = scmp.lt.s32.totalorder %s21, 1
      %s283 = scalar_select %p282, %s21, 1
      %p284 = scmp.lt.s32.totalorder %s281, 31
      %s285 = scalar_select %p284, %s281, 31
      %s286 = smul.addr %s283, 32
      %s287 = sadd.s32 %s285, %s286
      %s288 = smul.addr %s287, 4
      %s289 = scalar_lea.vmem %s6, %s288
      %s290 = smul.u32 32, %s22
      %v292 = vld [vmem:[%s279] sm:$0xf]
      %v293 = vld [vmem:[%s279 + $0x4] sm:$0xf]
      %v294 = vld [vmem:[%s279 + $0x8] sm:$0xf]
      %v295 = vld [vmem:[%s279 + $0xc] sm:$0xf]
      %v296 = vld [vmem:[%s279 + $0x10] sm:$0xf]
      %v297 = vld [vmem:[%s279 + $0x14] sm:$0xf]
      %v298 = vld [vmem:[%s279 + $0x18] sm:$0xf]
      %v299 = vld [vmem:[%s279 + $0x1c] sm:$0xf]
      %v300 = vld [vmem:[%s279 + $0x20] sm:$0xf]
      %v301 = vld [vmem:[%s279 + $0x24] sm:$0xf]
      %v302 = vld [vmem:[%s279 + $0x28] sm:$0xf]
      %v303 = vld [vmem:[%s279 + $0x2c] sm:$0xf]
      %v304 = vld [vmem:[%s279 + $0x30] sm:$0xf]
      %v305 = vld [vmem:[%s279 + $0x34] sm:$0xf]
      %v306 = vld [vmem:[%s279 + $0x38] sm:$0xf]
      %v307 = vld [vmem:[%s279 + $0x3c] sm:$0xf]
      %v308 = vld [vmem:[%s279 + $0x40] sm:$0xf]
      %v309 = vld [vmem:[%s279 + $0x44] sm:$0xf]
      %v310 = vld [vmem:[%s279 + $0x48] sm:$0xf]
      %v311 = vld [vmem:[%s279 + $0x4c] sm:$0xf]
      %v312 = vld [vmem:[%s279 + $0x50] sm:$0xf]
      %v313 = vld [vmem:[%s279 + $0x54] sm:$0xf]
      %v314 = vld [vmem:[%s279 + $0x58] sm:$0xf]
      %v315 = vld [vmem:[%s279 + $0x5c] sm:$0xf]
      %v316 = vld [vmem:[%s279 + $0x60] sm:$0xf]
      %v317 = vld [vmem:[%s279 + $0x64] sm:$0xf]
      %v318 = vld [vmem:[%s279 + $0x68] sm:$0xf]
      %v319 = vld [vmem:[%s279 + $0x6c] sm:$0xf]
      %v320 = vld [vmem:[%s279 + $0x70] sm:$0xf]
      %v321 = vld [vmem:[%s279 + $0x74] sm:$0xf]
      %v322 = vld [vmem:[%s279 + $0x78] sm:$0xf]
      %v323 = vld [vmem:[%s279 + $0x7c] sm:$0xf]
      %v324 = vld [vmem:[%s1] sm:$0xf]
      %v325 = vld [vmem:[%s1 + $0x4] sm:$0xf]
      %v326 = vld [vmem:[%s1 + $0x8] sm:$0xf]
      %v327 = vld [vmem:[%s1 + $0xc] sm:$0xf]
      %v328 = vld [vmem:[%s1 + $0x10] sm:$0x3]
      %v361 = vunpack.c.l.b16 %v292
      %v362 = vunpack.c.l.b16 %v293
      %v363 = vunpack.c.l.b16 %v294
      %v364 = vunpack.c.l.b16 %v295
      %v365 = vunpack.c.l.b16 %v296
      %v366 = vunpack.c.l.b16 %v297
      %v367 = vunpack.c.l.b16 %v298
      %v368 = vunpack.c.l.b16 %v299
      %v369 = vunpack.c.l.b16 %v300
      %v370 = vunpack.c.l.b16 %v301
      %v371 = vunpack.c.l.b16 %v302
      %v372 = vunpack.c.l.b16 %v303
      %v373 = vunpack.c.l.b16 %v304
      %v374 = vunpack.c.l.b16 %v305
      %v375 = vunpack.c.l.b16 %v306
      %v376 = vunpack.c.l.b16 %v307
      %v377 = vunpack.c.l.b16 %v308
      %v378 = vunpack.c.l.b16 %v309
      %v379 = vunpack.c.l.b16 %v310
      %v380 = vunpack.c.l.b16 %v311
      %v381 = vunpack.c.l.b16 %v312
      %v382 = vunpack.c.l.b16 %v313
      %v383 = vunpack.c.l.b16 %v314
      %v384 = vunpack.c.l.b16 %v315
      %v385 = vunpack.c.l.b16 %v316
      %v386 = vunpack.c.l.b16 %v317
      %v387 = vunpack.c.l.b16 %v318
      %v388 = vunpack.c.l.b16 %v319
      %v389 = vunpack.c.l.b16 %v320
      %v390 = vunpack.c.l.b16 %v321
      %v391 = vunpack.c.l.b16 %v322
      %v392 = vunpack.c.l.b16 %v323
      %v393 = vpack.c.b16 %v362, %v361
      %v394 = vpack.c.b16 %v364, %v363
      %v395 = vpack.c.b16 %v366, %v365
      %v396 = vpack.c.b16 %v368, %v367
      %v397 = vpack.c.b16 %v370, %v369
      %v398 = vpack.c.b16 %v372, %v371
      %v399 = vpack.c.b16 %v374, %v373
      %v400 = vpack.c.b16 %v376, %v375
      %v401 = vpack.c.b16 %v378, %v377
      %v402 = vpack.c.b16 %v380, %v379
      %v403 = vpack.c.b16 %v382, %v381
      %v404 = vpack.c.b16 %v384, %v383
      %v405 = vpack.c.b16 %v386, %v385
      %v406 = vpack.c.b16 %v388, %v387
      %v407 = vpack.c.b16 %v390, %v389
      %v408 = vpack.c.b16 %v392, %v391
      %v414 = vunpack.c.l.b16 %v324
      %v415 = vunpack.c.l.b16 %v325
      %v416 = vunpack.c.l.b16 %v326
      %v417 = vunpack.c.l.b16 %v327
      %v418 = vunpack.c.l.b16 %v328
      %v419 = vpack.c.b16 %v415, %v414
      %v420 = vpack.c.b16 %v417, %v416
      %v421 = vpack.c.b16 %v418, %v418
      %vm424 = vcmask 293888
      %v426 = vsel %vm424, %v393, 0
      %v429 = vsel %vm424, %v394, 0
      %v432 = vsel %vm424, %v395, 0
      %v435 = vsel %vm424, %v396, 0
      %v438 = vsel %vm424, %v397, 0
      %v441 = vsel %vm424, %v398, 0
      %v444 = vsel %vm424, %v399, 0
      %v447 = vsel %vm424, %v400, 0
      %v450 = vsel %vm424, %v401, 0
      %v453 = vsel %vm424, %v402, 0
      %v456 = vsel %vm424, %v403, 0
      %v459 = vsel %vm424, %v404, 0
      %v462 = vsel %vm424, %v405, 0
      %v465 = vsel %vm424, %v406, 0
      %v468 = vsel %vm424, %v407, 0
      %v471 = vsel %vm424, %v408, 0
      %vm473 = vcmask 1041408
      %v475 = vsel %vm473, %v421, 0
      %477 = vmatpush.bf16.msra.mxu0 0
      %478 = vmatpush.bf16.msra.mxu0 0
      %479 = vmatpush.bf16.msra.mxu0 0
      %480 = vmatpush.bf16.msra.mxu0 0
      %481 = vmatpush.bf16.msra.mxu0 0
      %482 = vmatpush.bf16.msra.mxu0 %v475
      %483 = vmatpush.bf16.msra.mxu0 %v420
      %484 = vmatpush.bf16.msra.mxu0 %v419
      %485 = vmatmul.bf16.gmra.mxu0 %v426
      %v486 = vpop.f32.mrf.mxu0
      %v487 = vadd.f32 0.0, %v486
      %v488 = vpop.f32.mrf.mxu0
      %v489 = vadd.f32 0.0, %v488
      %490 = vmatmul.bf16.gmra.mxu0 %v429
      %v491 = vpop.f32.mrf.mxu0
      %v492 = vadd.f32 0.0, %v491
      %v493 = vpop.f32.mrf.mxu0
      %v494 = vadd.f32 0.0, %v493
      %495 = vmatmul.bf16.gmra.mxu0 %v432
      %v496 = vpop.f32.mrf.mxu0
      %v497 = vadd.f32 0.0, %v496
      %v498 = vpop.f32.mrf.mxu0
      %v499 = vadd.f32 0.0, %v498
      %500 = vmatmul.bf16.gmra.mxu0 %v435
      %v501 = vpop.f32.mrf.mxu0
      %v502 = vadd.f32 0.0, %v501
      %v503 = vpop.f32.mrf.mxu0
      %v504 = vadd.f32 0.0, %v503
      %505 = vmatmul.bf16.gmra.mxu0 %v438
      %v506 = vpop.f32.mrf.mxu0
      %v507 = vadd.f32 0.0, %v506
      %v508 = vpop.f32.mrf.mxu0
      %v509 = vadd.f32 0.0, %v508
      %510 = vmatmul.bf16.gmra.mxu0 %v441
      %v511 = vpop.f32.mrf.mxu0
      %v512 = vadd.f32 0.0, %v511
      %v513 = vpop.f32.mrf.mxu0
      %v514 = vadd.f32 0.0, %v513
      %515 = vmatmul.bf16.gmra.mxu0 %v444
      %v516 = vpop.f32.mrf.mxu0
      %v517 = vadd.f32 0.0, %v516
      %v518 = vpop.f32.mrf.mxu0
      %v519 = vadd.f32 0.0, %v518
      %520 = vmatmul.bf16.gmra.mxu0 %v447
      %v521 = vpop.f32.mrf.mxu0
      %v522 = vadd.f32 0.0, %v521
      %v523 = vpop.f32.mrf.mxu0
      %v524 = vadd.f32 0.0, %v523
      %525 = vmatmul.bf16.gmra.mxu0 %v450
      %v526 = vpop.f32.mrf.mxu0
      %v527 = vadd.f32 0.0, %v526
      %v528 = vpop.f32.mrf.mxu0
      %v529 = vadd.f32 0.0, %v528
      %530 = vmatmul.bf16.gmra.mxu0 %v453
      %v531 = vpop.f32.mrf.mxu0
      %v532 = vadd.f32 0.0, %v531
      %v533 = vpop.f32.mrf.mxu0
      %v534 = vadd.f32 0.0, %v533
      %535 = vmatmul.bf16.gmra.mxu0 %v456
      %v536 = vpop.f32.mrf.mxu0
      %v537 = vadd.f32 0.0, %v536
      %v538 = vpop.f32.mrf.mxu0
      %v539 = vadd.f32 0.0, %v538
      %540 = vmatmul.bf16.gmra.mxu0 %v459
      %v541 = vpop.f32.mrf.mxu0
      %v542 = vadd.f32 0.0, %v541
      %v543 = vpop.f32.mrf.mxu0
      %v544 = vadd.f32 0.0, %v543
      %545 = vmatmul.bf16.gmra.mxu0 %v462
      %v546 = vpop.f32.mrf.mxu0
      %v547 = vadd.f32 0.0, %v546
      %v548 = vpop.f32.mrf.mxu0
      %v549 = vadd.f32 0.0, %v548
      %550 = vmatmul.bf16.gmra.mxu0 %v465
      %v551 = vpop.f32.mrf.mxu0
      %v552 = vadd.f32 0.0, %v551
      %v553 = vpop.f32.mrf.mxu0
      %v554 = vadd.f32 0.0, %v553
      %555 = vmatmul.bf16.gmra.mxu0 %v468
      %v556 = vpop.f32.mrf.mxu0
      %v557 = vadd.f32 0.0, %v556
      %v558 = vpop.f32.mrf.mxu0
      %v559 = vadd.f32 0.0, %v558
      %560 = vmatmul.bf16.gmra.mxu0 %v471
      %v561 = vpop.f32.mrf.mxu0
      %v562 = vadd.f32 0.0, %v561
      %v563 = vpop.f32.mrf.mxu0
      %v564 = vadd.f32 0.0, %v563
      %565 = vdwg.mxu0
      %v566 = vld [vmem:[%s3] sm:$0x1]
      %v568 = vperm.slane %v566, 0
      %v570 = vmul.f32 %v487, %v568
      %v571 = vmul.f32 %v489, %v568
      %v572 = vmul.f32 %v492, %v568
      %v573 = vmul.f32 %v494, %v568
      %v574 = vmul.f32 %v497, %v568
      %v575 = vmul.f32 %v499, %v568
      %v576 = vmul.f32 %v502, %v568
      %v577 = vmul.f32 %v504, %v568
      %v578 = vmul.f32 %v507, %v568
      %v579 = vmul.f32 %v509, %v568
      %v580 = vmul.f32 %v512, %v568
      %v581 = vmul.f32 %v514, %v568
      %v582 = vmul.f32 %v517, %v568
      %v583 = vmul.f32 %v519, %v568
      %v584 = vmul.f32 %v522, %v568
      %v585 = vmul.f32 %v524, %v568
      %v586 = vmul.f32 %v527, %v568
      %v587 = vmul.f32 %v529, %v568
      %v588 = vmul.f32 %v532, %v568
      %v589 = vmul.f32 %v534, %v568
      %v590 = vmul.f32 %v537, %v568
      %v591 = vmul.f32 %v539, %v568
      %v592 = vmul.f32 %v542, %v568
      %v593 = vmul.f32 %v544, %v568
      %v594 = vmul.f32 %v547, %v568
      %v595 = vmul.f32 %v549, %v568
      %v596 = vmul.f32 %v552, %v568
      %v597 = vmul.f32 %v554, %v568
      %v598 = vmul.f32 %v557, %v568
      %v599 = vmul.f32 %v559, %v568
      %v600 = vmul.f32 %v562, %v568
      %v601 = vmul.f32 %v564, %v568
      %v602 = vld [vmem:[%s4] sm:$0x1]
      %v604 = vperm.slane %v602, 0
      %v606 = vadd.f32 %v570, %v604
      %v607 = vadd.f32 %v571, %v604
      %v608 = vadd.f32 %v572, %v604
      %v609 = vadd.f32 %v573, %v604
      %v610 = vadd.f32 %v574, %v604
      %v611 = vadd.f32 %v575, %v604
      %v612 = vadd.f32 %v576, %v604
      %v613 = vadd.f32 %v577, %v604
      %v614 = vadd.f32 %v578, %v604
      %v615 = vadd.f32 %v579, %v604
      %v616 = vadd.f32 %v580, %v604
      %v617 = vadd.f32 %v581, %v604
      %v618 = vadd.f32 %v582, %v604
      %v619 = vadd.f32 %v583, %v604
      %v620 = vadd.f32 %v584, %v604
      %v621 = vadd.f32 %v585, %v604
      %v622 = vadd.f32 %v586, %v604
      %v623 = vadd.f32 %v587, %v604
      %v624 = vadd.f32 %v588, %v604
      %v625 = vadd.f32 %v589, %v604
      %v626 = vadd.f32 %v590, %v604
      %v627 = vadd.f32 %v591, %v604
      %v628 = vadd.f32 %v592, %v604
      %v629 = vadd.f32 %v593, %v604
      %v630 = vadd.f32 %v594, %v604
      %v631 = vadd.f32 %v595, %v604
      %v632 = vadd.f32 %v596, %v604
      %v633 = vadd.f32 %v597, %v604
      %v634 = vadd.f32 %v598, %v604
      %v635 = vadd.f32 %v599, %v604
      %v636 = vadd.f32 %v600, %v604
      %v637 = vadd.f32 %v601, %v604
      %v638 = vmax.f32 %v606, 0.0
      %v639 = vmax.f32 %v607, 0.0
      %v640 = vmax.f32 %v608, 0.0
      %v641 = vmax.f32 %v609, 0.0
      %v642 = vmax.f32 %v610, 0.0
      %v643 = vmax.f32 %v611, 0.0
      %v644 = vmax.f32 %v612, 0.0
      %v645 = vmax.f32 %v613, 0.0
      %v646 = vmax.f32 %v614, 0.0
      %v647 = vmax.f32 %v615, 0.0
      %v648 = vmax.f32 %v616, 0.0
      %v649 = vmax.f32 %v617, 0.0
      %v650 = vmax.f32 %v618, 0.0
      %v651 = vmax.f32 %v619, 0.0
      %v652 = vmax.f32 %v620, 0.0
      %v653 = vmax.f32 %v621, 0.0
      %v654 = vmax.f32 %v622, 0.0
      %v655 = vmax.f32 %v623, 0.0
      %v656 = vmax.f32 %v624, 0.0
      %v657 = vmax.f32 %v625, 0.0
      %v658 = vmax.f32 %v626, 0.0
      %v659 = vmax.f32 %v627, 0.0
      %v660 = vmax.f32 %v628, 0.0
      %v661 = vmax.f32 %v629, 0.0
      %v662 = vmax.f32 %v630, 0.0
      %v663 = vmax.f32 %v631, 0.0
      %v664 = vmax.f32 %v632, 0.0
      %v665 = vmax.f32 %v633, 0.0
      %v666 = vmax.f32 %v634, 0.0
      %v667 = vmax.f32 %v635, 0.0
      %v668 = vmax.f32 %v636, 0.0
      %v669 = vmax.f32 %v637, 0.0
      %v670 = vld [vmem:[%s2] sm:$0xf]
      %v671 = vld [vmem:[%s2 + $0x4] sm:$0xf]
      %v672 = vld [vmem:[%s2 + $0x8] sm:$0xf]
      %v673 = vld [vmem:[%s2 + $0xc] sm:$0xf]
      %v674 = vld [vmem:[%s2 + $0x10] sm:$0x3]
      %v680 = vunpack.c.l.b16 %v670
      %v681 = vunpack.c.l.b16 %v671
      %v682 = vunpack.c.l.b16 %v672
      %v683 = vunpack.c.l.b16 %v673
      %v684 = vunpack.c.l.b16 %v674
      %v685 = vpack.c.b16 %v681, %v680
      %v686 = vpack.c.b16 %v683, %v682
      %v687 = vpack.c.b16 %v684, %v684
      %v691 = vsel %vm473, %v687, 0
      %693 = vmatpush.bf16.msra.mxu0 0
      %694 = vmatpush.bf16.msra.mxu0 0
      %695 = vmatpush.bf16.msra.mxu0 0
      %696 = vmatpush.bf16.msra.mxu0 0
      %697 = vmatpush.bf16.msra.mxu0 0
      %698 = vmatpush.bf16.msra.mxu0 %v691
      %699 = vmatpush.bf16.msra.mxu0 %v686
      %700 = vmatpush.bf16.msra.mxu0 %v685
      %701 = vmatmul.bf16.gmra.mxu0 %v426
      %v702 = vpop.f32.mrf.mxu0
      %v703 = vadd.f32 0.0, %v702
      %v704 = vpop.f32.mrf.mxu0
      %v705 = vadd.f32 0.0, %v704
      %706 = vmatmul.bf16.gmra.mxu0 %v429
      %v707 = vpop.f32.mrf.mxu0
      %v708 = vadd.f32 0.0, %v707
      %v709 = vpop.f32.mrf.mxu0
      %v710 = vadd.f32 0.0, %v709
      %711 = vmatmul.bf16.gmra.mxu0 %v432
      %v712 = vpop.f32.mrf.mxu0
      %v713 = vadd.f32 0.0, %v712
      %v714 = vpop.f32.mrf.mxu0
      %v715 = vadd.f32 0.0, %v714
      %716 = vmatmul.bf16.gmra.mxu0 %v435
      %v717 = vpop.f32.mrf.mxu0
      %v718 = vadd.f32 0.0, %v717
      %v719 = vpop.f32.mrf.mxu0
      %v720 = vadd.f32 0.0, %v719
      %721 = vmatmul.bf16.gmra.mxu0 %v438
      %v722 = vpop.f32.mrf.mxu0
      %v723 = vadd.f32 0.0, %v722
      %v724 = vpop.f32.mrf.mxu0
      %v725 = vadd.f32 0.0, %v724
      %726 = vmatmul.bf16.gmra.mxu0 %v441
      %v727 = vpop.f32.mrf.mxu0
      %v728 = vadd.f32 0.0, %v727
      %v729 = vpop.f32.mrf.mxu0
      %v730 = vadd.f32 0.0, %v729
      %731 = vmatmul.bf16.gmra.mxu0 %v444
      %v732 = vpop.f32.mrf.mxu0
      %v733 = vadd.f32 0.0, %v732
      %v734 = vpop.f32.mrf.mxu0
      %v735 = vadd.f32 0.0, %v734
      %736 = vmatmul.bf16.gmra.mxu0 %v447
      %v737 = vpop.f32.mrf.mxu0
      %v738 = vadd.f32 0.0, %v737
      %v739 = vpop.f32.mrf.mxu0
      %v740 = vadd.f32 0.0, %v739
      %741 = vmatmul.bf16.gmra.mxu0 %v450
      %v742 = vpop.f32.mrf.mxu0
      %v743 = vadd.f32 0.0, %v742
      %v744 = vpop.f32.mrf.mxu0
      %v745 = vadd.f32 0.0, %v744
      %746 = vmatmul.bf16.gmra.mxu0 %v453
      %v747 = vpop.f32.mrf.mxu0
      %v748 = vadd.f32 0.0, %v747
      %v749 = vpop.f32.mrf.mxu0
      %v750 = vadd.f32 0.0, %v749
      %751 = vmatmul.bf16.gmra.mxu0 %v456
      %v752 = vpop.f32.mrf.mxu0
      %v753 = vadd.f32 0.0, %v752
      %v754 = vpop.f32.mrf.mxu0
      %v755 = vadd.f32 0.0, %v754
      %756 = vmatmul.bf16.gmra.mxu0 %v459
      %v757 = vpop.f32.mrf.mxu0
      %v758 = vadd.f32 0.0, %v757
      %v759 = vpop.f32.mrf.mxu0
      %v760 = vadd.f32 0.0, %v759
      %761 = vmatmul.bf16.gmra.mxu0 %v462
      %v762 = vpop.f32.mrf.mxu0
      %v763 = vadd.f32 0.0, %v762
      %v764 = vpop.f32.mrf.mxu0
      %v765 = vadd.f32 0.0, %v764
      %766 = vmatmul.bf16.gmra.mxu0 %v465
      %v767 = vpop.f32.mrf.mxu0
      %v768 = vadd.f32 0.0, %v767
      %v769 = vpop.f32.mrf.mxu0
      %v770 = vadd.f32 0.0, %v769
      %771 = vmatmul.bf16.gmra.mxu0 %v468
      %v772 = vpop.f32.mrf.mxu0
      %v773 = vadd.f32 0.0, %v772
      %v774 = vpop.f32.mrf.mxu0
      %v775 = vadd.f32 0.0, %v774
      %776 = vmatmul.bf16.gmra.mxu0 %v471
      %v777 = vpop.f32.mrf.mxu0
      %v778 = vadd.f32 0.0, %v777
      %v779 = vpop.f32.mrf.mxu0
      %v780 = vadd.f32 0.0, %v779
      %781 = vdwg.mxu0
      %v782 = vadd.f32 %v638, %v703
      %v783 = vadd.f32 %v639, %v705
      %v784 = vadd.f32 %v640, %v708
      %v785 = vadd.f32 %v641, %v710
      %v786 = vadd.f32 %v642, %v713
      %v787 = vadd.f32 %v643, %v715
      %v788 = vadd.f32 %v644, %v718
      %v789 = vadd.f32 %v645, %v720
      %v790 = vadd.f32 %v646, %v723
      %v791 = vadd.f32 %v647, %v725
      %v792 = vadd.f32 %v648, %v728
      %v793 = vadd.f32 %v649, %v730
      %v794 = vadd.f32 %v650, %v733
      %v795 = vadd.f32 %v651, %v735
      %v796 = vadd.f32 %v652, %v738
      %v797 = vadd.f32 %v653, %v740
      %v798 = vadd.f32 %v654, %v743
      %v799 = vadd.f32 %v655, %v745
      %v800 = vadd.f32 %v656, %v748
      %v801 = vadd.f32 %v657, %v750
      %v802 = vadd.f32 %v658, %v753
      %v803 = vadd.f32 %v659, %v755
      %v804 = vadd.f32 %v660, %v758
      %v805 = vadd.f32 %v661, %v760
      %v806 = vadd.f32 %v662, %v763
      %v807 = vadd.f32 %v663, %v765
      %v808 = vadd.f32 %v664, %v768
      %v809 = vadd.f32 %v665, %v770
      %v810 = vadd.f32 %v666, %v773
      %v811 = vadd.f32 %v667, %v775
      %v812 = vadd.f32 %v668, %v778
      %v813 = vadd.f32 %v669, %v780
      %v814 = vld [vmem:[%s5] sm:$0x1]
      %v816 = vperm.slane %v814, 0
      %v818 = vadd.f32 %v782, %v816
      %v819 = vadd.f32 %v783, %v816
      %v820 = vadd.f32 %v784, %v816
      %v821 = vadd.f32 %v785, %v816
      %v822 = vadd.f32 %v786, %v816
      %v823 = vadd.f32 %v787, %v816
      %v824 = vadd.f32 %v788, %v816
      %v825 = vadd.f32 %v789, %v816
      %v826 = vadd.f32 %v790, %v816
      %v827 = vadd.f32 %v791, %v816
      %v828 = vadd.f32 %v792, %v816
      %v829 = vadd.f32 %v793, %v816
      %v830 = vadd.f32 %v794, %v816
      %v831 = vadd.f32 %v795, %v816
      %v832 = vadd.f32 %v796, %v816
      %v833 = vadd.f32 %v797, %v816
      %v834 = vadd.f32 %v798, %v816
      %v835 = vadd.f32 %v799, %v816
      %v836 = vadd.f32 %v800, %v816
      %v837 = vadd.f32 %v801, %v816
      %v838 = vadd.f32 %v802, %v816
      %v839 = vadd.f32 %v803, %v816
      %v840 = vadd.f32 %v804, %v816
      %v841 = vadd.f32 %v805, %v816
      %v842 = vadd.f32 %v806, %v816
      %v843 = vadd.f32 %v807, %v816
      %v844 = vadd.f32 %v808, %v816
      %v845 = vadd.f32 %v809, %v816
      %v846 = vadd.f32 %v810, %v816
      %v847 = vadd.f32 %v811, %v816
      %v848 = vadd.f32 %v812, %v816
      %v849 = vadd.f32 %v813, %v816
      %v850 = vpack.c.bf16 %v818, %v818
      %v851 = vpack.c.bf16 %v819, %v819
      %v852 = vpack.c.bf16 %v820, %v820
      %v853 = vpack.c.bf16 %v821, %v821
      %v854 = vpack.c.bf16 %v822, %v822
      %v855 = vpack.c.bf16 %v823, %v823
      %v856 = vpack.c.bf16 %v824, %v824
      %v857 = vpack.c.bf16 %v825, %v825
      %v858 = vpack.c.bf16 %v826, %v826
      %v859 = vpack.c.bf16 %v827, %v827
      %v860 = vpack.c.bf16 %v828, %v828
      %v861 = vpack.c.bf16 %v829, %v829
      %v862 = vpack.c.bf16 %v830, %v830
      %v863 = vpack.c.bf16 %v831, %v831
      %v864 = vpack.c.bf16 %v832, %v832
      %v865 = vpack.c.bf16 %v833, %v833
      %v866 = vpack.c.bf16 %v834, %v834
      %v867 = vpack.c.bf16 %v835, %v835
      %v868 = vpack.c.bf16 %v836, %v836
      %v869 = vpack.c.bf16 %v837, %v837
      %v870 = vpack.c.bf16 %v838, %v838
      %v871 = vpack.c.bf16 %v839, %v839
      %v872 = vpack.c.bf16 %v840, %v840
      %v873 = vpack.c.bf16 %v841, %v841
      %v874 = vpack.c.bf16 %v842, %v842
      %v875 = vpack.c.bf16 %v843, %v843
      %v876 = vpack.c.bf16 %v844, %v844
      %v877 = vpack.c.bf16 %v845, %v845
      %v878 = vpack.c.bf16 %v846, %v846
      %v879 = vpack.c.bf16 %v847, %v847
      %v880 = vpack.c.bf16 %v848, %v848
      %v881 = vpack.c.bf16 %v849, %v849
      %882 = vst [vmem:[%s289] sm:$0xf] %v850
      %883 = vst [vmem:[%s289 + $0x4] sm:$0xf] %v851
      %884 = vst [vmem:[%s289 + $0x8] sm:$0xf] %v852
      %885 = vst [vmem:[%s289 + $0xc] sm:$0xf] %v853
      %886 = vst [vmem:[%s289 + $0x10] sm:$0xf] %v854
      %887 = vst [vmem:[%s289 + $0x14] sm:$0xf] %v855
      %888 = vst [vmem:[%s289 + $0x18] sm:$0xf] %v856
      %889 = vst [vmem:[%s289 + $0x1c] sm:$0xf] %v857
      %890 = vst [vmem:[%s289 + $0x20] sm:$0xf] %v858
      %891 = vst [vmem:[%s289 + $0x24] sm:$0xf] %v859
      %892 = vst [vmem:[%s289 + $0x28] sm:$0xf] %v860
      %893 = vst [vmem:[%s289 + $0x2c] sm:$0xf] %v861
      %894 = vst [vmem:[%s289 + $0x30] sm:$0xf] %v862
      %895 = vst [vmem:[%s289 + $0x34] sm:$0xf] %v863
      %896 = vst [vmem:[%s289 + $0x38] sm:$0xf] %v864
      %897 = vst [vmem:[%s289 + $0x3c] sm:$0xf] %v865
      %898 = vst [vmem:[%s289 + $0x40] sm:$0xf] %v866
      %899 = vst [vmem:[%s289 + $0x44] sm:$0xf] %v867
      %900 = vst [vmem:[%s289 + $0x48] sm:$0xf] %v868
      %901 = vst [vmem:[%s289 + $0x4c] sm:$0xf] %v869
      %902 = vst [vmem:[%s289 + $0x50] sm:$0xf] %v870
      %903 = vst [vmem:[%s289 + $0x54] sm:$0xf] %v871
      %904 = vst [vmem:[%s289 + $0x58] sm:$0xf] %v872
      %905 = vst [vmem:[%s289 + $0x5c] sm:$0xf] %v873
      %906 = vst [vmem:[%s289 + $0x60] sm:$0xf] %v874
      %907 = vst [vmem:[%s289 + $0x64] sm:$0xf] %v875
      %908 = vst [vmem:[%s289 + $0x68] sm:$0xf] %v876
      %909 = vst [vmem:[%s289 + $0x6c] sm:$0xf] %v877
      %910 = vst [vmem:[%s289 + $0x70] sm:$0xf] %v878
      %911 = vst [vmem:[%s289 + $0x74] sm:$0xf] %v879
      %912 = vst [vmem:[%s289 + $0x78] sm:$0xf] %v880
      %913 = vst [vmem:[%s289 + $0x7c] sm:$0xf] %v881
      %s914 = smul.u32 32, %s22
      %p915 = scmp.lt.s32.totalorder %s21, 1
      %s916 = scalar_select %p915, %s21, 1
      %p917 = scmp.lt.s32.totalorder %s914, 31
      %s918 = scalar_select %p917, %s914, 31
      %s919 = smul.addr %s916, 32
      %s920 = sadd.s32 %s918, %s919
      %s921 = smul.addr %s920, 4
      %s922 = scalar_lea.vmem %s6, %s921
      // Predicated region
      $region45: #{_lambda_.1} parent=43 // pred_check
        %p923 = pneg %p182
      $region46: #{_lambda_.1} parent=43 // pred_check_branch
        %925 = sbr.rel (%p923) target = $region48
      $region47: #{_lambda_.1} parent=43 // pred_region
        %s926 = smul.u32 32, %s22
      $region48: #{_lambda_.1} parent=43 // pred_fallthru
        _
    $region44: #{_lambda_.1} parent=5 // pred_fallthru
      _
    %p927 = scmp.le.s32.totalorder 2, %s12
    // Predicated region
    $region49: #{_lambda_.1} parent=5 // pred_check
      %p928 = pneg %p927
    $region50: #{_lambda_.1} parent=5 // pred_check_branch
      %930 = sbr.rel (%p928) target = $region52
    $region51: #{_lambda_.1} parent=5 // pred_region
      %s931 = ssub.s32 %s12, 2
      // Predicated region
      $region53: #{_lambda_.1} parent=51 // pred_check
        %p932 = pneg %p188
      $region54: #{_lambda_.1} parent=51 // pred_check_branch
        %934 = sbr.rel (%p932) target = $region56
      $region55: #{_lambda_.1} parent=51 // pred_region
        %s935 = smul.u32 32, %s24
        %p936 = scmp.lt.s32.totalorder %s23, 1
        %s937 = scalar_select %p936, %s23, 1
        %p938 = scmp.lt.s32.totalorder %s935, 31
        %s939 = scalar_select %p938, %s935, 31
        %s940 = smul.addr %s937, 32
        %s941 = sadd.s32 %s939, %s940
        %s942 = smul.addr %s941, 4
        %s943 = scalar_lea.vmem %s6, %s942
      $region56: #{_lambda_.1} parent=51 // pred_fallthru
        _
    $region52: #{_lambda_.1} parent=5 // pred_fallthru
      _
  $region6: #{_lambda_.1} parent=0 // loop_footer
    %s16 = sadd.s32 1, %s12
  $region7: #{_lambda_.1} parent=0 // loop_footer_branch
    %11 = sbr.rel target = $region3
  $region8: #{_lambda_.1} parent=0 // loop_exit
    _

</llo_original>
